<compile_context>
chip_gen: v5e
topology: v5e:2x2
jax: 0.10.0
libtpu: 0.0.40
codegen_flags: <defaults>
</compile_context>

<pallas_src>
import functools

import jax
import jax.numpy as jnp
from jax import lax
from jax.experimental import pallas as pl
from jax.experimental.pallas import tpu as pltpu

_BN_EPS = 1e-5
_LANE = 128


# ----------------------------- Pallas kernel -------------------------------

def _mlp_fused_kernel(x_ref, w_ref, p_ref, o_ref, *, num_layers, last_activation):
    """Entire MLP in one kernel: chain of Linear(+BN+ReLU) layers.

    x_ref : (N, Dpad)            activations (feature axis zero-padded)
    w_ref : (L, Dpad, Dpad)      per-layer weights, pre-transposed, zero-padded
    p_ref : (L, 3, Dpad)         per-layer [bias; gamma; beta], zero-padded
    o_ref : (N, Dpad)            final (padded) output
    """
    y = x_ref[...].astype(jnp.float32)                       # (N, Dpad)

    for i in range(num_layers):                               # unrolled (L is small/static)
        w = w_ref[i]                                          # (Dpad, Dpad)
        p = p_ref[i]                                          # (3, Dpad)
        b = p[0:1, :]
        y = jnp.dot(y, w, preferred_element_type=jnp.float32) + b

        if i < num_layers - 1 or last_activation:
            gamma = p[1:2, :]
            beta = p[2:3, :]
            # BatchNorm1d, training mode: per-feature batch mean / biased var.
            # One-pass stats (single cross-sublane reduction of y and y*y).
            mean = jnp.mean(y, axis=0, keepdims=True)             # (1, Dpad)
            mean_sq = jnp.mean(y * y, axis=0, keepdims=True)
            var = jnp.maximum(mean_sq - mean * mean, 0.0)
            y = (y - mean) * lax.rsqrt(var + _BN_EPS) * gamma + beta
            y = jnp.maximum(y, 0.0)
            # Padded lanes: y==0, gamma==0, beta==0  ->  stay exactly 0.

    o_ref[...] = y


# ------------------------------ wrappers ------------------------------------

def _round_up(d, m=_LANE):
    return ((d + m - 1) // m) * m


def _pad_to(a, shape):
    return jnp.pad(a, [(0, s - d) for d, s in zip(a.shape, shape)])


@functools.partial(jax.jit, static_argnames=("last_activation",))
def mlp_forward(x, params, last_activation=True):
    """Run the whole MLP as one fused Pallas kernel."""
    n, d_in = x.shape
    num_layers = len(params)
    d_out_last = params[-1]["w"].shape[1]

    # Uniform lane-dense padded width for every layer (all dims <= 128 here).
    dpad = max(_round_up(d_in),
               max(_round_up(p["w"].shape[1]) for p in params))

    x_pad = _pad_to(x.astype(jnp.float32), (n, dpad))
    w_stack = jnp.stack(
        [_pad_to(p["w"].astype(jnp.float32), (dpad, dpad)) for p in params])
    # Packed per-layer params: row 0 = bias, row 1 = gamma, row 2 = beta.
    # Zero padding is essential (padded gamma/beta = 0 keeps padded lanes zero).
    pbg = jnp.stack([
        jnp.stack([_pad_to(p["b"].astype(jnp.float32), (dpad,)),
                   _pad_to(p["gamma"].astype(jnp.float32), (dpad,)),
                   _pad_to(p["beta"].astype(jnp.float32), (dpad,))])
        for p in params
    ])                                                       # (L, 3, dpad)

    kernel = functools.partial(_mlp_fused_kernel,
                               num_layers=num_layers,
                               last_activation=last_activation)

    out_pad = pl.pallas_call(
        kernel,
        out_shape=jax.ShapeDtypeStruct((n, dpad), jnp.float32),
        in_specs=[
            pl.BlockSpec((n, dpad), lambda: (0, 0)),
            pl.BlockSpec((num_layers, dpad, dpad), lambda: (0, 0, 0)),
            pl.BlockSpec((num_layers, 3, dpad), lambda: (0, 0, 0)),
        ],
        out_specs=pl.BlockSpec((n, dpad), lambda: (0, 0)),
        compiler_params=pltpu.CompilerParams(
            # Tiny buffers (< 200 KiB total); explicit cap keeps headroom on
            # v7x's 64 MiB physical / 32 MiB default scoped VMEM.
            vmem_limit_bytes=16 * 1024 * 1024),
    )(x_pad, w_stack, pbg)

    # TODO(synk): if batch N or hidden widths are scaled up, switch to an
    # N-tiled grid with a two-pass (sum / sum-of-squares accumulator) BN.
    return out_pad[:, :d_out_last]


def init_mlp_params(key, hidden_size):
    """Deterministic init mirroring nn.Linear / nn.BatchNorm1d defaults."""
    params = []
    for i in range(len(hidden_size) - 1):
        d_in, d_out = hidden_size[i], hidden_size[i + 1]
        key, kw, kb = jax.random.split(key, 3)
        bound = 1.0 / (d_in ** 0.5)
        w = jax.random.uniform(kw, (d_in, d_out), jnp.float32, -bound, bound)
        b = jax.random.uniform(kb, (d_out,), jnp.float32, -bound, bound)
        gamma = jnp.ones((d_out,), jnp.float32)
        beta = jnp.zeros((d_out,), jnp.float32)
        params.append({"w": w, "b": b, "gamma": gamma, "beta": beta})
    return params


# ------------------------------- reference ----------------------------------

def mlp_reference(x, params, last_activation=True):
    n_layers = len(params)
    for i, p in enumerate(params):
        y = x @ p["w"] + p["b"]
        is_last = i == n_layers - 1
        if (not is_last) or last_activation:
            mean = jnp.mean(y, axis=0, keepdims=True)
            var = jnp.mean((y - mean) ** 2, axis=0, keepdims=True)
            y = (y - mean) / jnp.sqrt(var + _BN_EPS)
            y = y * p["gamma"] + p["beta"]
            y = jnp.maximum(y, 0.0)
        x = y
    return x


# --------------------------------- main --------------------------------------

if __name__ == "__main__":
    key = jax.random.PRNGKey(0)
    hidden_size = [32, 64, 16]      # MLP(hidden_size=[32, 64, 16])
    batch = 8

    key, kx, kp = jax.random.split(key, 3)
    x = jax.random.normal(kx, (batch, hidden_size[0]), jnp.float32)
    params = init_mlp_params(kp, hidden_size)

    out = mlp_forward(x, params, last_activation=True)
    out = jax.block_until_ready(out)

    ref = mlp_reference(x, params, last_activation=True)
    assert out.shape == (batch, hidden_size[-1])
    assert jnp.allclose(out, ref, atol=1e-4, rtol=1e-4), "mismatch vs reference"

    # Also exercise the no-final-activation path once.
    out2 = jax.block_until_ready(mlp_forward(x, params, last_activation=False))
    ref2 = mlp_reference(x, params, last_activation=False)
    assert jnp.allclose(out2, ref2, atol=1e-4, rtol=1e-4), "mismatch (last_activation=False)"

    print("KERNEL_OK")
</pallas_src>

<mosaic_0001>
module attributes {stable_mosaic.version = 11 : i64} {
  func.func @_mlp_fused_kernel(%arg0: memref<8x128xf32, #tpu.memory_space<vmem>>, %arg1: memref<2x128x128xf32, #tpu.memory_space<vmem>>, %arg2: memref<2x3x128xf32, #tpu.memory_space<vmem>>, %arg3: memref<8x128xf32, #tpu.memory_space<vmem>>) attributes {dimension_semantics = [], scalar_prefetch = 0 : i64, scratch_operands = 0 : i64, tpu.core_type = #tpu.core_type<tc>} {
    %c0 = arith.constant 0 : index
    %c0_0 = arith.constant 0 : index
    %0 = vector.load %arg0[%c0, %c0_0] : memref<8x128xf32, #tpu.memory_space<vmem>>, vector<8x128xf32>
    %c0_1 = arith.constant 0 : index
    %c0_2 = arith.constant 0 : index
    %c0_3 = arith.constant 0 : index
    %1 = vector.load %arg1[%c0_1, %c0_2, %c0_3] : memref<2x128x128xf32, #tpu.memory_space<vmem>>, vector<1x128x128xf32>
    %2 = vector.shape_cast %1 : vector<1x128x128xf32> to vector<128x128xf32>
    %c0_4 = arith.constant 0 : index
    %c0_5 = arith.constant 0 : index
    %c0_6 = arith.constant 0 : index
    %3 = vector.load %arg2[%c0_4, %c0_5, %c0_6] : memref<2x3x128xf32, #tpu.memory_space<vmem>>, vector<1x3x128xf32>
    %4 = vector.shape_cast %3 : vector<1x3x128xf32> to vector<3x128xf32>
    %5 = vector.extract_strided_slice %4 {offsets = [0, 0], sizes = [1, 128], strides = [1, 1]} : vector<3x128xf32> to vector<1x128xf32>
    %cst = arith.constant dense<0.000000e+00> : vector<8x128xf32>
    %6 = tpu.matmul %0, %2, %cst {dimension_numbers = #tpu.dot_dimension_numbers<[1], [0], [0], [1], [0, 0, 1, 1], [], []>} : vector<8x128xf32>, vector<128x128xf32>, vector<8x128xf32> -> vector<8x128xf32>
    %7 = vector.broadcast %5 : vector<1x128xf32> to vector<8x128xf32>
    %8 = arith.addf %6, %7 : vector<8x128xf32>
    %9 = vector.extract_strided_slice %4 {offsets = [1, 0], sizes = [1, 128], strides = [1, 1]} : vector<3x128xf32> to vector<1x128xf32>
    %10 = vector.extract_strided_slice %4 {offsets = [2, 0], sizes = [1, 128], strides = [1, 1]} : vector<3x128xf32> to vector<1x128xf32>
    %cst_7 = arith.constant dense<0.000000e+00> : vector<128xf32>
    %11 = vector.multi_reduction <add>, %8, %cst_7 [0] : vector<8x128xf32> to vector<128xf32>
    %12 = vector.shape_cast %11 : vector<128xf32> to vector<1x128xf32>
    %cst_8 = arith.constant 8.000000e+00 : f32
    %13 = vector.broadcast %cst_8 : f32 to vector<1x128xf32>
    %14 = arith.divf %12, %13 : vector<1x128xf32>
    %15 = arith.mulf %8, %8 : vector<8x128xf32>
    %cst_9 = arith.constant dense<0.000000e+00> : vector<128xf32>
    %16 = vector.multi_reduction <add>, %15, %cst_9 [0] : vector<8x128xf32> to vector<128xf32>
    %17 = vector.shape_cast %16 : vector<128xf32> to vector<1x128xf32>
    %cst_10 = arith.constant 8.000000e+00 : f32
    %18 = vector.broadcast %cst_10 : f32 to vector<1x128xf32>
    %19 = arith.divf %17, %18 : vector<1x128xf32>
    %20 = arith.mulf %14, %14 : vector<1x128xf32>
    %21 = arith.subf %19, %20 : vector<1x128xf32>
    %cst_11 = arith.constant 0.000000e+00 : f32
    %22 = vector.broadcast %cst_11 : f32 to vector<1x128xf32>
    %23 = arith.maximumf %21, %22 : vector<1x128xf32>
    %24 = vector.broadcast %14 : vector<1x128xf32> to vector<8x128xf32>
    %25 = arith.subf %8, %24 : vector<8x128xf32>
    %cst_12 = arith.constant 9.99999974E-6 : f32
    %26 = vector.broadcast %cst_12 : f32 to vector<1x128xf32>
    %27 = arith.addf %23, %26 : vector<1x128xf32>
    %28 = math.rsqrt %27 : vector<1x128xf32>
    %29 = vector.broadcast %28 : vector<1x128xf32> to vector<8x128xf32>
    %30 = arith.mulf %25, %29 : vector<8x128xf32>
    %31 = vector.broadcast %9 : vector<1x128xf32> to vector<8x128xf32>
    %32 = arith.mulf %30, %31 : vector<8x128xf32>
    %33 = vector.broadcast %10 : vector<1x128xf32> to vector<8x128xf32>
    %34 = arith.addf %32, %33 : vector<8x128xf32>
    %cst_13 = arith.constant 0.000000e+00 : f32
    %35 = vector.broadcast %cst_13 : f32 to vector<8x128xf32>
    %36 = arith.maximumf %34, %35 : vector<8x128xf32>
    %c1 = arith.constant 1 : index
    %c0_14 = arith.constant 0 : index
    %c0_15 = arith.constant 0 : index
    %37 = vector.load %arg1[%c1, %c0_14, %c0_15] : memref<2x128x128xf32, #tpu.memory_space<vmem>>, vector<1x128x128xf32>
    %38 = vector.shape_cast %37 : vector<1x128x128xf32> to vector<128x128xf32>
    %c1_16 = arith.constant 1 : index
    %c0_17 = arith.constant 0 : index
    %c0_18 = arith.constant 0 : index
    %39 = vector.load %arg2[%c1_16, %c0_17, %c0_18] : memref<2x3x128xf32, #tpu.memory_space<vmem>>, vector<1x3x128xf32>
    %40 = vector.shape_cast %39 : vector<1x3x128xf32> to vector<3x128xf32>
    %41 = vector.extract_strided_slice %40 {offsets = [0, 0], sizes = [1, 128], strides = [1, 1]} : vector<3x128xf32> to vector<1x128xf32>
    %cst_19 = arith.constant dense<0.000000e+00> : vector<8x128xf32>
    %42 = tpu.matmul %36, %38, %cst_19 {dimension_numbers = #tpu.dot_dimension_numbers<[1], [0], [0], [1], [0, 0, 1, 1], [], []>} : vector<8x128xf32>, vector<128x128xf32>, vector<8x128xf32> -> vector<8x128xf32>
    %43 = vector.broadcast %41 : vector<1x128xf32> to vector<8x128xf32>
    %44 = arith.addf %42, %43 : vector<8x128xf32>
    %45 = vector.extract_strided_slice %40 {offsets = [1, 0], sizes = [1, 128], strides = [1, 1]} : vector<3x128xf32> to vector<1x128xf32>
    %46 = vector.extract_strided_slice %40 {offsets = [2, 0], sizes = [1, 128], strides = [1, 1]} : vector<3x128xf32> to vector<1x128xf32>
    %cst_20 = arith.constant dense<0.000000e+00> : vector<128xf32>
    %47 = vector.multi_reduction <add>, %44, %cst_20 [0] : vector<8x128xf32> to vector<128xf32>
    %48 = vector.shape_cast %47 : vector<128xf32> to vector<1x128xf32>
    %cst_21 = arith.constant 8.000000e+00 : f32
    %49 = vector.broadcast %cst_21 : f32 to vector<1x128xf32>
    %50 = arith.divf %48, %49 : vector<1x128xf32>
    %51 = arith.mulf %44, %44 : vector<8x128xf32>
    %cst_22 = arith.constant dense<0.000000e+00> : vector<128xf32>
    %52 = vector.multi_reduction <add>, %51, %cst_22 [0] : vector<8x128xf32> to vector<128xf32>
    %53 = vector.shape_cast %52 : vector<128xf32> to vector<1x128xf32>
    %cst_23 = arith.constant 8.000000e+00 : f32
    %54 = vector.broadcast %cst_23 : f32 to vector<1x128xf32>
    %55 = arith.divf %53, %54 : vector<1x128xf32>
    %56 = arith.mulf %50, %50 : vector<1x128xf32>
    %57 = arith.subf %55, %56 : vector<1x128xf32>
    %cst_24 = arith.constant 0.000000e+00 : f32
    %58 = vector.broadcast %cst_24 : f32 to vector<1x128xf32>
    %59 = arith.maximumf %57, %58 : vector<1x128xf32>
    %60 = vector.broadcast %50 : vector<1x128xf32> to vector<8x128xf32>
    %61 = arith.subf %44, %60 : vector<8x128xf32>
    %cst_25 = arith.constant 9.99999974E-6 : f32
    %62 = vector.broadcast %cst_25 : f32 to vector<1x128xf32>
    %63 = arith.addf %59, %62 : vector<1x128xf32>
    %64 = math.rsqrt %63 : vector<1x128xf32>
    %65 = vector.broadcast %64 : vector<1x128xf32> to vector<8x128xf32>
    %66 = arith.mulf %61, %65 : vector<8x128xf32>
    %67 = vector.broadcast %45 : vector<1x128xf32> to vector<8x128xf32>
    %68 = arith.mulf %66, %67 : vector<8x128xf32>
    %69 = vector.broadcast %46 : vector<1x128xf32> to vector<8x128xf32>
    %70 = arith.addf %68, %69 : vector<8x128xf32>
    %cst_26 = arith.constant 0.000000e+00 : f32
    %71 = vector.broadcast %cst_26 : f32 to vector<8x128xf32>
    %72 = arith.maximumf %70, %71 : vector<8x128xf32>
    %c0_27 = arith.constant 0 : index
    %c0_28 = arith.constant 0 : index
    %73 = vector.load %arg3[%c0_27, %c0_28] : memref<8x128xf32, #tpu.memory_space<vmem>>, vector<8x128xf32>
    tpu.vector_store %arg3[%c0_27, %c0_28], %72 {strides = array<i32>} : memref<8x128xf32, #tpu.memory_space<vmem>>, vector<8x128xf32>,
    return
  }
}

</mosaic_0001>

<llo_original>
// kernel: mlp_forward.1
$region0: #{mlp_forward.1}
  #allocation0 [shape = 'u32[]', space=smem, size = 0x4, offset = 0x4, fixed_abs, tag = 'smem constant byte address 0x4 - core index']
  #allocation1 [shape = 'u32[72,128]{1,0:T(1,128)}', space=vmem, size = 0x9000, scoped, tag = 'internal scratch']
  %s0 = inlined_call_operand.vmem [shape: f32[8,128], index: 0, kind: input, shape index: {}]
  %s1 = inlined_call_operand.vmem [shape: f32[2,128,128], index: 1, kind: input, shape index: {}]
  %s2 = inlined_call_operand.vmem [shape: f32[2,3,128], index: 2, kind: input, shape index: {}]
  %s3 = inlined_call_operand.hbm [shape: f32[8,128], index: 3, kind: output, shape index: {}]
  %s4 = sld [smem:[#allocation0]]
  $region22: #{mlp_forward.1} parent=0
    _
  %s6 = ssub.s32 1, %s4
  %s7 = scalar_select 0, %s6, %s4
  $region1: #{mlp_forward.1} parent=0
    #allocation2 [shape = 'u8[4096]{0}', space=vmem, size = 0x1000, scoped, tag = 'output window, operand 0, single buffered']
    #allocation3 [shape = 's32[1]{0}', space=sflag, size = 0x4, scoped, tag = 'scoped memory for mlp_forward.1']
    %8 = vsyncpa [#allocation3], 0
    // Predicated region
    $region2: #{mlp_forward.1} parent=1 // pred_check
      _
    $region3: #{mlp_forward.1} parent=1 // pred_check_branch
      %10 = sbr.rel (0) target = $region5
    $region4: #{mlp_forward.1} parent=1 // pred_region
      _
    $region5: #{mlp_forward.1} parent=1 // pred_fallthru
      _
    // Predicated region
    $region6: #{mlp_forward.1} parent=1 // pred_check
      _
    $region7: #{mlp_forward.1} parent=1 // pred_check_branch
      %12 = sbr.rel (0) target = $region9
    $region8: #{mlp_forward.1} parent=1 // pred_region
      _
    $region9: #{mlp_forward.1} parent=1 // pred_fallthru
      _
    // Predicated region
    $region10: #{mlp_forward.1} parent=1 // pred_check
      _
    $region11: #{mlp_forward.1} parent=1 // pred_check_branch
      %14 = sbr.rel (0) target = $region13
    $region12: #{mlp_forward.1} parent=1 // pred_region
      _
    $region13: #{mlp_forward.1} parent=1 // pred_fallthru
      _
    %v15 = vld [vmem:[%s0] sm:$0xff]
    %v16 = vld [vmem:[%s1] sm:$0xff]
    %v17 = vld [vmem:[%s1 + $0x8] sm:$0xff]
    %v18 = vld [vmem:[%s1 + $0x10] sm:$0xff]
    %v19 = vld [vmem:[%s1 + $0x18] sm:$0xff]
    %v20 = vld [vmem:[%s1 + $0x20] sm:$0xff]
    %v21 = vld [vmem:[%s1 + $0x28] sm:$0xff]
    %v22 = vld [vmem:[%s1 + $0x30] sm:$0xff]
    %v23 = vld [vmem:[%s1 + $0x38] sm:$0xff]
    %v24 = vld [vmem:[%s1 + $0x40] sm:$0xff]
    %v25 = vld [vmem:[%s1 + $0x48] sm:$0xff]
    %v26 = vld [vmem:[%s1 + $0x50] sm:$0xff]
    %v27 = vld [vmem:[%s1 + $0x58] sm:$0xff]
    %v28 = vld [vmem:[%s1 + $0x60] sm:$0xff]
    %v29 = vld [vmem:[%s1 + $0x68] sm:$0xff]
    %v30 = vld [vmem:[%s1 + $0x70] sm:$0xff]
    %v31 = vld [vmem:[%s1 + $0x78] sm:$0xff]
    %v32 = vld [vmem:[%s2] sm:$0x7]
    %v33 = vperm.slane %v32, 0
    %34 = vmatpush.msra.mxu0 %v31
    %35 = vmatpush.msra.mxu0 %v30
    %36 = vmatpush.msra.mxu0 %v29
    %37 = vmatpush.msra.mxu0 %v28
    %38 = vmatpush.msra.mxu0 %v27
    %39 = vmatpush.msra.mxu0 %v26
    %40 = vmatpush.msra.mxu0 %v25
    %41 = vmatpush.msra.mxu0 %v24
    %42 = vmatpush.msra.mxu0 %v23
    %43 = vmatpush.msra.mxu0 %v22
    %44 = vmatpush.msra.mxu0 %v21
    %45 = vmatpush.msra.mxu0 %v20
    %46 = vmatpush.msra.mxu0 %v19
    %47 = vmatpush.msra.mxu0 %v18
    %48 = vmatpush.msra.mxu0 %v17
    %49 = vmatpush.msra.mxu0 %v16
    %50 = vmatmul.f32.gmra.mxu0 %v15
    %v51 = vpop.f32.mrf.mxu0
    %v52 = vadd.f32 %v33, %v51
    %53 = vdwg.mxu0
    %v54 = vrot.slane %v52, 4
    %v55 = vadd.f32 %v52, %v54
    %v56 = vrot.slane %v55, 2
    %v57 = vadd.f32 %v55, %v56
    %v58 = vrot.slane %v57, 1
    %v59 = vadd.f32 %v57, %v58
    %v60 = vrcp.pop 8.0
    %v61 = vmul.f32 8.0, %v60
    %v62 = vsub.f32 1.0, %v61
    %v63 = vmul.f32 %v60, %v62
    %v64 = vadd.f32 %v60, %v63
    %vm65 = vweird.f32 %v60
    %v66 = vsel %vm65, %v60, %v64
    %v67 = vmul.f32 %v59, %v66
    %v68 = vmul.f32 %v52, %v52
    %v69 = vrot.slane %v68, 4
    %v70 = vadd.f32 %v68, %v69
    %v71 = vrot.slane %v70, 2
    %v72 = vadd.f32 %v70, %v71
    %v73 = vrot.slane %v72, 1
    %v74 = vadd.f32 %v72, %v73
    %v75 = vmul.f32 %v74, %v66
    %v76 = vmul.f32 %v67, %v67
    %v77 = vsub.f32 %v75, %v76
    %v78 = vmax.f32 %v77, 0.0
    %v79 = vsub.f32 %v52, %v67
    %v80 = vadd.f32 %v78, 1e-05
    %v81 = vrsqrt.pop %v80
    %v82 = vmul.f32 %v81, %v80
    %v83 = vmul.f32 %v82, %v81
    %v84 = vmul.f32 0.5, %v83
    %v85 = vsub.f32 1.5, %v84
    %v86 = vmul.f32 %v81, %v85
    %vm87 = vweird.f32 %v80
    %vm88 = vweird.f32 %v81
    %vm89 = vmor %vm87, %vm88
    %v90 = vsel %vm89, %v81, %v86
    %v91 = vmul.f32 %v79, %v90
    %v92 = vperm.slane %v32, 1
    %v93 = vmul.f32 %v91, %v92
    %v94 = vperm.slane %v32, 2
    %v95 = vadd.f32 %v93, %v94
    %v96 = vmax.f32 %v95, 0.0
    %s97 = scalar_lea.vmem %s1, 128
    %v98 = vld [vmem:[%s97] sm:$0xff]
    %v99 = vld [vmem:[%s97 + $0x8] sm:$0xff]
    %v100 = vld [vmem:[%s97 + $0x10] sm:$0xff]
    %v101 = vld [vmem:[%s97 + $0x18] sm:$0xff]
    %v102 = vld [vmem:[%s97 + $0x20] sm:$0xff]
    %v103 = vld [vmem:[%s97 + $0x28] sm:$0xff]
    %v104 = vld [vmem:[%s97 + $0x30] sm:$0xff]
    %v105 = vld [vmem:[%s97 + $0x38] sm:$0xff]
    %v106 = vld [vmem:[%s97 + $0x40] sm:$0xff]
    %v107 = vld [vmem:[%s97 + $0x48] sm:$0xff]
    %v108 = vld [vmem:[%s97 + $0x50] sm:$0xff]
    %v109 = vld [vmem:[%s97 + $0x58] sm:$0xff]
    %v110 = vld [vmem:[%s97 + $0x60] sm:$0xff]
    %v111 = vld [vmem:[%s97 + $0x68] sm:$0xff]
    %v112 = vld [vmem:[%s97 + $0x70] sm:$0xff]
    %v113 = vld [vmem:[%s97 + $0x78] sm:$0xff]
    %s114 = scalar_lea.vmem %s2, 4
    %v115 = vld [vmem:[%s114] sm:$0x7]
    %v116 = vperm.slane %v115, 0
    %117 = vmatpush.msra.mxu0 %v113
    %118 = vmatpush.msra.mxu0 %v112
    %119 = vmatpush.msra.mxu0 %v111
    %120 = vmatpush.msra.mxu0 %v110
    %121 = vmatpush.msra.mxu0 %v109
    %122 = vmatpush.msra.mxu0 %v108
    %123 = vmatpush.msra.mxu0 %v107
    %124 = vmatpush.msra.mxu0 %v106
    %125 = vmatpush.msra.mxu0 %v105
    %126 = vmatpush.msra.mxu0 %v104
    %127 = vmatpush.msra.mxu0 %v103
    %128 = vmatpush.msra.mxu0 %v102
    %129 = vmatpush.msra.mxu0 %v101
    %130 = vmatpush.msra.mxu0 %v100
    %131 = vmatpush.msra.mxu0 %v99
    %132 = vmatpush.msra.mxu0 %v98
    %133 = vmatmul.f32.gmra.mxu0 %v96
    %v134 = vpop.f32.mrf.mxu0
    %v135 = vadd.f32 %v116, %v134
    %136 = vdwg.mxu0
    %v137 = vrot.slane %v135, 4
    %v138 = vadd.f32 %v135, %v137
    %v139 = vrot.slane %v138, 2
    %v140 = vadd.f32 %v138, %v139
    %v141 = vrot.slane %v140, 1
    %v142 = vadd.f32 %v140, %v141
    %v143 = vmul.f32 %v142, %v66
    %v144 = vmul.f32 %v135, %v135
    %v145 = vrot.slane %v144, 4
    %v146 = vadd.f32 %v144, %v145
    %v147 = vrot.slane %v146, 2
    %v148 = vadd.f32 %v146, %v147
    %v149 = vrot.slane %v148, 1
    %v150 = vadd.f32 %v148, %v149
    %v151 = vmul.f32 %v150, %v66
    %v152 = vmul.f32 %v143, %v143
    %v153 = vsub.f32 %v151, %v152
    %v154 = vmax.f32 %v153, 0.0
    %v155 = vsub.f32 %v135, %v143
    %v156 = vadd.f32 %v154, 1e-05
    %v157 = vrsqrt.pop %v156
    %v158 = vmul.f32 %v157, %v156
    %v159 = vmul.f32 %v158, %v157
    %v160 = vmul.f32 0.5, %v159
    %v161 = vsub.f32 1.5, %v160
    %v162 = vmul.f32 %v157, %v161
    %vm163 = vweird.f32 %v156
    %vm164 = vweird.f32 %v157
    %vm165 = vmor %vm163, %vm164
    %v166 = vsel %vm165, %v157, %v162
    %v167 = vmul.f32 %v155, %v166
    %v168 = vperm.slane %v115, 1
    %v169 = vmul.f32 %v167, %v168
    %v170 = vperm.slane %v115, 2
    %v171 = vadd.f32 %v169, %v170
    %v172 = vmax.f32 %v171, 0.0
    %173 = vst [vmem:[#allocation2] sm:$0xff] %v172
    // Predicated region
    $region14: #{mlp_forward.1} parent=1 // pred_check
      _
    $region15: #{mlp_forward.1} parent=1 // pred_check_branch
      %175 = sbr.rel (0) target = $region17
    $region16: #{mlp_forward.1} parent=1 // pred_region
      %177 = vsyncadd [#allocation3], 0
      %s179 = sshll.u32 [#allocation2], 4
      %s180 = int_to_ptr.vmem [resolvable:$true] %s179
      %s181 = sshll.u32 %s3, 4
      %s182 = int_to_ptr.hbm [resolvable:$true] %s181
      %184 = dma.vmem_to_hbm [thread:$0]  %s180, 128, %s182, [#allocation3]
    $region17: #{mlp_forward.1} parent=1 // pred_fallthru
      _
    // Predicated region
    $region18: #{mlp_forward.1} parent=1 // pred_check
      _
    $region19: #{mlp_forward.1} parent=1 // pred_check_branch
      %186 = sbr.rel (0) target = $region21
    $region20: #{mlp_forward.1} parent=1 // pred_region
      %188 = dma.done [#allocation3], 128
    $region21: #{mlp_forward.1} parent=1 // pred_fallthru
      _
    %189 = vsyncpa [#allocation3], 1

</llo_original>
